<compile_context>
chip_gen: v7x
topology: tpu7x:2x2x1
jax: 0.10.0
libtpu: 0.0.40
codegen_flags: <defaults>
</compile_context>

<pallas_src>
import jax
import jax.numpy as jnp
from jax.experimental import pallas as pl
from jax.experimental.pallas import tpu as pltpu


# Tap order (kh, kw) row-major; must match the w1 column order built in the wrapper.
_TAPS = [(dy, dx) for dy in (-1, 0, 1) for dx in (-1, 0, 1)]


def _make_resblock_kernel(H, W, Cin, C, NB, compute_dtype):
    HW = H * W

    def kernel(masks_ref, x_ref, w1_ref, w2_ref, o_ref):
        # masks_ref: (9, HW)        f32 {0,1} halo-validity masks (constant block)
        # x_ref    : (NB, Cin, HW)  activations (channel-major, lanes = H*W)
        # w1_ref   : (C, 9*Cin+1)   3x3 weights + bias column, cols = (kh, kw, cin) + bias
        # w2_ref   : (Cin, C+1)     1x1 weights + bias column
        # o_ref    : (NB, Cin, HW)
        masks = masks_ref[...]                               # (9, HW) f32
        w1 = w1_ref[...]                                     # compute_dtype
        w2 = w2_ref[...]                                     # compute_dtype

        # Hoisted constants (JAX does not CSE broadcast_in_dim inside loops).
        mask_rows = [masks[t:t + 1, :] for t in range(9)]    # each (1, HW)
        ones_f32 = jnp.ones((1, HW), jnp.float32)
        ones_cd = jnp.ones((1, HW), compute_dtype)

        # Static unrolled loop over the NB images in this grid step.
        for n in range(NB):
            x_n = x_ref[n]                                   # (Cin, HW) f32

            # im2col in registers: 9 lane-rolled + border-masked copies of x_n,
            # plus a ones row (bias), -> one MXU dot with K = 9*Cin + 1.
            slabs = []
            for tap, (dy, dx) in enumerate(_TAPS):
                shift = (-(dy * W + dx)) % HW
                shifted = pltpu.roll(x_n, shift=shift, axis=1) if shift else x_n
                if (dy, dx) != (0, 0):
                    shifted = shifted * mask_rows[tap]       # zero the halo
                slabs.append(shifted)
            slabs.append(ones_f32)
            patches = jnp.concatenate(slabs, axis=0).astype(compute_dtype)

            # 3x3 conv + bias as ONE matmul: (C, 9*Cin+1) @ (9*Cin+1, HW), f32 acc.
            h = jnp.dot(w1, patches, preferred_element_type=jnp.float32)
            h = jnp.maximum(h, 0.0)                          # ReLU

            # 1x1 conv + bias: (Cin, C+1) @ (C+1, HW), then residual (f32).
            h_aug = jnp.concatenate([h.astype(compute_dtype), ones_cd], axis=0)
            y = jnp.dot(w2, h_aug, preferred_element_type=jnp.float32)
            o_ref[n] = (y + x_n).astype(o_ref.dtype)         # lane-dense store

    return kernel


def _pick_images_per_step(N, max_nb=8):
    """Largest divisor of N (capped) that still leaves >= 2 grid steps."""
    best = 1
    for d in range(2, min(N, max_nb) + 1):
        if N % d == 0 and (N // d) >= 2:
            best = d
    return best


def resblock2d_pallas(x_nchw, w1_oihw, b1, w2_oihw, b2, *,
                      compute_dtype=jnp.bfloat16, images_per_step=None):
    """Forward of ResBlock2D.  x_nchw: (N, Cin, H, W)."""
    N, Cin, H, W = x_nchw.shape
    C = w1_oihw.shape[0]
    assert w1_oihw.shape == (C, Cin, 3, 3)
    assert w2_oihw.shape == (Cin, C, 1, 1)
    HW = H * W

    NB = images_per_step if images_per_step is not None else _pick_images_per_step(N)
    assert N % NB == 0, "images_per_step must divide the batch"
    grid_n = N // NB

    # Free reshape (contiguous) -- no transpose, no pad, single activation input.
    x_flat = x_nchw.reshape(N, Cin, HW)

    # Geometry-only halo masks, computed once in the wrapper (constant block).
    idx = jnp.arange(HW, dtype=jnp.int32)
    row, col = idx // W, idx % W

    def tap_mask(dy, dx):
        valid = jnp.ones((HW,), dtype=bool)
        if dy < 0:
            valid = valid & (row >= -dy)
        if dy > 0:
            valid = valid & (row < H - dy)
        if dx < 0:
            valid = valid & (col >= -dx)
        if dx > 0:
            valid = valid & (col < W - dx)
        return valid

    masks = jnp.stack([tap_mask(dy, dx) for dy, dx in _TAPS]).astype(jnp.float32)

    # Weight plumbing (tiny).  Bias folded as an extra column -> MXU accumulate.
    w1_mat = jnp.transpose(w1_oihw, (0, 2, 3, 1)).reshape(C, 9 * Cin)     # (kh,kw,cin)
    w1_aug = jnp.concatenate([w1_mat, b1.reshape(C, 1)], axis=1).astype(compute_dtype)
    w2_mat = w2_oihw[:, :, 0, 0]                                          # (Cin, C)
    w2_aug = jnp.concatenate([w2_mat, b2.reshape(Cin, 1)], axis=1).astype(compute_dtype)

    kernel = _make_resblock_kernel(H, W, Cin, C, NB, compute_dtype)

    out_flat = pl.pallas_call(
        kernel,
        out_shape=jax.ShapeDtypeStruct((N, Cin, HW), x_nchw.dtype),
        grid_spec=pltpu.PrefetchScalarGridSpec(
            num_scalar_prefetch=0,
            grid=(grid_n,),   # "parallel" batch-block axis; >=2 steps when N allows.
            in_specs=[
                pl.BlockSpec((9, HW), lambda g: (0, 0)),          # masks (resident)
                pl.BlockSpec((NB, Cin, HW), lambda g: (g, 0, 0)),  # activations
                pl.BlockSpec((C, 9 * Cin + 1), lambda g: (0, 0)),  # w1 + bias col
                pl.BlockSpec((Cin, C + 1), lambda g: (0, 0)),      # w2 + bias col
            ],
            out_specs=pl.BlockSpec((NB, Cin, HW), lambda g: (g, 0, 0)),
        ),
        compiler_params=pltpu.CompilerParams(
            dimension_semantics=("parallel",),
            # Explicit scoped-VMEM budget; fits v7x's 64 MiB physical VMEM too.
            vmem_limit_bytes=32 << 20),
        # Production scaling: tile over ROWS with overlapping (rows+2)-row blocks,
        # never a flat second grid axis over HW (roll halo would wrap inside tiles).
    )(masks, x_flat, w1_aug, w2_aug)

    return out_flat.reshape(N, Cin, H, W)


def resblock2d_reference(x_nchw, w1_oihw, b1, w2_oihw, b2):
    """Pure-JAX reference matching the PyTorch forward pass (NCHW)."""
    dn = jax.lax.conv_dimension_numbers(x_nchw.shape, w1_oihw.shape,
                                        ("NCHW", "OIHW", "NCHW"))
    h = jax.lax.conv_general_dilated(x_nchw, w1_oihw, (1, 1), ((1, 1), (1, 1)),
                                     dimension_numbers=dn)
    h = jnp.maximum(h + b1.reshape(1, -1, 1, 1), 0.0)
    dn2 = jax.lax.conv_dimension_numbers(h.shape, w2_oihw.shape,
                                         ("NCHW", "OIHW", "NCHW"))
    y = jax.lax.conv_general_dilated(h, w2_oihw, (1, 1), ((0, 0), (0, 0)),
                                     dimension_numbers=dn2)
    return y + b2.reshape(1, -1, 1, 1) + x_nchw


if __name__ == "__main__":
    # Small deterministic setup: batch=2, in_channel=4, channel=8, spatial=16.
    N, Cin, C, H, W = 2, 4, 8, 16, 16
    key = jax.random.PRNGKey(0)
    k_x, k_w1, k_b1, k_w2, k_b2, k_x4 = jax.random.split(key, 6)

    x = jax.random.normal(k_x, (N, Cin, H, W), dtype=jnp.float32)

    # Deterministic parameter init (PyTorch-Conv2d-like uniform bounds).
    bound1 = 1.0 / (Cin * 3 * 3) ** 0.5
    w1 = jax.random.uniform(k_w1, (C, Cin, 3, 3), jnp.float32, -bound1, bound1)
    b1 = jax.random.uniform(k_b1, (C,), jnp.float32, -bound1, bound1)
    bound2 = 1.0 / (C * 1 * 1) ** 0.5
    w2 = jax.random.uniform(k_w2, (Cin, C, 1, 1), jnp.float32, -bound2, bound2)
    b2 = jax.random.uniform(k_b2, (Cin,), jnp.float32, -bound2, bound2)

    ref = jax.block_until_ready(resblock2d_reference(x, w1, b1, w2, b2))

    # f32 operand path: bitwise-close to the f32 reference.
    out_f32 = jax.block_until_ready(
        resblock2d_pallas(x, w1, b1, w2, b2, compute_dtype=jnp.float32))
    assert out_f32.shape == (N, Cin, H, W)
    assert jnp.allclose(out_f32, ref, atol=1e-4, rtol=1e-4), "f32 mismatch vs reference"

    # Default bf16 operand path (f32 accumulate/residual): looser tolerance expected.
    out_bf16 = jax.block_until_ready(resblock2d_pallas(x, w1, b1, w2, b2))
    assert jnp.allclose(out_bf16, ref, atol=5e-2, rtol=5e-2), "bf16 mismatch vs reference"

    # Batched-per-step path: N=4 -> 2 images per grid step, 2 parallel steps.
    x4 = jax.random.normal(k_x4, (4, Cin, H, W), dtype=jnp.float32)
    ref4 = jax.block_until_ready(resblock2d_reference(x4, w1, b1, w2, b2))
    out4 = jax.block_until_ready(
        resblock2d_pallas(x4, w1, b1, w2, b2, compute_dtype=jnp.float32))
    assert jnp.allclose(out4, ref4, atol=1e-4, rtol=1e-4), "batched-step mismatch"

    print("KERNEL_OK")
</pallas_src>

<mosaic_0001>
module attributes {stable_mosaic.version = 11 : i64} {
  func.func @kernel(%arg0: i32, %arg1: memref<9x256xf32, #tpu.memory_space<vmem>>, %arg2: memref<1x4x256xf32, #tpu.memory_space<vmem>>, %arg3: memref<8x37xf32, #tpu.memory_space<vmem>>, %arg4: memref<4x9xf32, #tpu.memory_space<vmem>>, %arg5: memref<1x4x256xf32, #tpu.memory_space<vmem>>) attributes {dimension_semantics = [#tpu.dimension_semantics<parallel>], iteration_bounds = array<i64: 2>, scalar_prefetch = 0 : i64, scratch_operands = 0 : i64, tpu.core_type = #tpu.core_type<tc>, window_params = [{pipeline_mode = #tpu.pipeline_mode<synchronous>, transform_indices = @transform_0, window_bounds = array<i64: 9, 256>}, {transform_indices = @transform_1, window_bounds = array<i64: 1, 4, 256>}, {pipeline_mode = #tpu.pipeline_mode<synchronous>, transform_indices = @transform_2, window_bounds = array<i64: 8, 37>}, {pipeline_mode = #tpu.pipeline_mode<synchronous>, transform_indices = @transform_3, window_bounds = array<i64: 4, 9>}, {transform_indices = @transform_4, window_bounds = array<i64: 1, 4, 256>}]} {
    %c0 = arith.constant 0 : index
    %c0_0 = arith.constant 0 : index
    %0 = vector.load %arg1[%c0, %c0_0] : memref<9x256xf32, #tpu.memory_space<vmem>>, vector<9x256xf32>
    %c0_1 = arith.constant 0 : index
    %c0_2 = arith.constant 0 : index
    %1 = vector.load %arg3[%c0_1, %c0_2] : memref<8x37xf32, #tpu.memory_space<vmem>>, vector<8x37xf32>
    %c0_3 = arith.constant 0 : index
    %c0_4 = arith.constant 0 : index
    %2 = vector.load %arg4[%c0_3, %c0_4] : memref<4x9xf32, #tpu.memory_space<vmem>>, vector<4x9xf32>
    %3 = vector.extract_strided_slice %0 {offsets = [0, 0], sizes = [1, 256], strides = [1, 1]} : vector<9x256xf32> to vector<1x256xf32>
    %4 = vector.extract_strided_slice %0 {offsets = [1, 0], sizes = [1, 256], strides = [1, 1]} : vector<9x256xf32> to vector<1x256xf32>
    %5 = vector.extract_strided_slice %0 {offsets = [2, 0], sizes = [1, 256], strides = [1, 1]} : vector<9x256xf32> to vector<1x256xf32>
    %6 = vector.extract_strided_slice %0 {offsets = [3, 0], sizes = [1, 256], strides = [1, 1]} : vector<9x256xf32> to vector<1x256xf32>
    %7 = vector.extract_strided_slice %0 {offsets = [5, 0], sizes = [1, 256], strides = [1, 1]} : vector<9x256xf32> to vector<1x256xf32>
    %8 = vector.extract_strided_slice %0 {offsets = [6, 0], sizes = [1, 256], strides = [1, 1]} : vector<9x256xf32> to vector<1x256xf32>
    %9 = vector.extract_strided_slice %0 {offsets = [7, 0], sizes = [1, 256], strides = [1, 1]} : vector<9x256xf32> to vector<1x256xf32>
    %10 = vector.extract_strided_slice %0 {offsets = [8, 0], sizes = [1, 256], strides = [1, 1]} : vector<9x256xf32> to vector<1x256xf32>
    %cst = arith.constant 1.000000e+00 : f32
    %11 = vector.broadcast %cst : f32 to vector<1x256xf32>
    %cst_5 = arith.constant 1.000000e+00 : f32
    %12 = vector.broadcast %cst_5 : f32 to vector<1x256xf32>
    %c0_6 = arith.constant 0 : index
    %c0_7 = arith.constant 0 : index
    %c0_8 = arith.constant 0 : index
    %13 = vector.load %arg2[%c0_6, %c0_7, %c0_8] : memref<1x4x256xf32, #tpu.memory_space<vmem>>, vector<1x4x256xf32>
    %14 = vector.shape_cast %13 : vector<1x4x256xf32> to vector<4x256xf32>
    %c17_i32 = arith.constant 17 : i32
    %15 = tpu.dynamic_rotate %14 by %c17_i32 dim 1 : vector<4x256xf32>, i32 -> vector<4x256xf32>
    %16 = vector.broadcast %3 : vector<1x256xf32> to vector<4x256xf32>
    %17 = arith.mulf %15, %16 : vector<4x256xf32>
    %c16_i32 = arith.constant 16 : i32
    %18 = tpu.dynamic_rotate %14 by %c16_i32 dim 1 : vector<4x256xf32>, i32 -> vector<4x256xf32>
    %19 = vector.broadcast %4 : vector<1x256xf32> to vector<4x256xf32>
    %20 = arith.mulf %18, %19 : vector<4x256xf32>
    %c15_i32 = arith.constant 15 : i32
    %21 = tpu.dynamic_rotate %14 by %c15_i32 dim 1 : vector<4x256xf32>, i32 -> vector<4x256xf32>
    %22 = vector.broadcast %5 : vector<1x256xf32> to vector<4x256xf32>
    %23 = arith.mulf %21, %22 : vector<4x256xf32>
    %c1_i32 = arith.constant 1 : i32
    %24 = tpu.dynamic_rotate %14 by %c1_i32 dim 1 : vector<4x256xf32>, i32 -> vector<4x256xf32>
    %25 = vector.broadcast %6 : vector<1x256xf32> to vector<4x256xf32>
    %26 = arith.mulf %24, %25 : vector<4x256xf32>
    %c255_i32 = arith.constant 255 : i32
    %27 = tpu.dynamic_rotate %14 by %c255_i32 dim 1 : vector<4x256xf32>, i32 -> vector<4x256xf32>
    %28 = vector.broadcast %7 : vector<1x256xf32> to vector<4x256xf32>
    %29 = arith.mulf %27, %28 : vector<4x256xf32>
    %c241_i32 = arith.constant 241 : i32
    %30 = tpu.dynamic_rotate %14 by %c241_i32 dim 1 : vector<4x256xf32>, i32 -> vector<4x256xf32>
    %31 = vector.broadcast %8 : vector<1x256xf32> to vector<4x256xf32>
    %32 = arith.mulf %30, %31 : vector<4x256xf32>
    %c240_i32 = arith.constant 240 : i32
    %33 = tpu.dynamic_rotate %14 by %c240_i32 dim 1 : vector<4x256xf32>, i32 -> vector<4x256xf32>
    %34 = vector.broadcast %9 : vector<1x256xf32> to vector<4x256xf32>
    %35 = arith.mulf %33, %34 : vector<4x256xf32>
    %c239_i32 = arith.constant 239 : i32
    %36 = tpu.dynamic_rotate %14 by %c239_i32 dim 1 : vector<4x256xf32>, i32 -> vector<4x256xf32>
    %37 = vector.broadcast %10 : vector<1x256xf32> to vector<4x256xf32>
    %38 = arith.mulf %36, %37 : vector<4x256xf32>
    %39 = tpu.concatenate %17, %20, %23, %26, %14, %29, %32, %35, %38, %11 in 0 : vector<4x256xf32>, vector<4x256xf32>, vector<4x256xf32>, vector<4x256xf32>, vector<4x256xf32>, vector<4x256xf32>, vector<4x256xf32>, vector<4x256xf32>, vector<4x256xf32>, vector<1x256xf32> -> vector<37x256xf32>
    %cst_9 = arith.constant dense<0.000000e+00> : vector<8x256xf32>
    %40 = tpu.matmul %1, %39, %cst_9 {dimension_numbers = #tpu.dot_dimension_numbers<[1], [0], [0], [1], [0, 0, 1, 1], [], []>} : vector<8x37xf32>, vector<37x256xf32>, vector<8x256xf32> -> vector<8x256xf32>
    %cst_10 = arith.constant 0.000000e+00 : f32
    %41 = vector.broadcast %cst_10 : f32 to vector<8x256xf32>
    %42 = arith.maximumf %40, %41 : vector<8x256xf32>
    %43 = tpu.concatenate %42, %12 in 0 : vector<8x256xf32>, vector<1x256xf32> -> vector<9x256xf32>
    %cst_11 = arith.constant dense<0.000000e+00> : vector<4x256xf32>
    %44 = tpu.matmul %2, %43, %cst_11 {dimension_numbers = #tpu.dot_dimension_numbers<[1], [0], [0], [1], [0, 0, 1, 1], [], []>} : vector<4x9xf32>, vector<9x256xf32>, vector<4x256xf32> -> vector<4x256xf32>
    %45 = arith.addf %44, %14 : vector<4x256xf32>
    %c0_12 = arith.constant 0 : index
    %c0_13 = arith.constant 0 : index
    %c0_14 = arith.constant 0 : index
    %46 = vector.load %arg5[%c0_12, %c0_13, %c0_14] : memref<1x4x256xf32, #tpu.memory_space<vmem>>, vector<1x4x256xf32>
    %47 = vector.shape_cast %46 : vector<1x4x256xf32> to vector<4x256xf32>
    %48 = vector.shape_cast %45 : vector<4x256xf32> to vector<1x4x256xf32>
    tpu.vector_store %arg5[%c0_12, %c0_13, %c0_14], %48 {strides = array<i32>} : memref<1x4x256xf32, #tpu.memory_space<vmem>>, vector<1x4x256xf32>,
    return
  }
  func.func @transform_0(%arg0: i32) -> (i32, i32) {
    %c0_i32 = arith.constant 0 : i32
    %c0_i32_0 = arith.constant 0 : i32
    %c0_i32_1 = arith.constant 0 : i32
    return %c0_i32, %c0_i32_0 : i32, i32
  }
  func.func @transform_1(%arg0: i32) -> (i32, i32, i32) {
    %c0_i32 = arith.constant 0 : i32
    %c0_i32_0 = arith.constant 0 : i32
    %c0_i32_1 = arith.constant 0 : i32
    return %arg0, %c0_i32, %c0_i32_0 : i32, i32, i32
  }
  func.func @transform_2(%arg0: i32) -> (i32, i32) {
    %c0_i32 = arith.constant 0 : i32
    %c0_i32_0 = arith.constant 0 : i32
    %c0_i32_1 = arith.constant 0 : i32
    return %c0_i32, %c0_i32_0 : i32, i32
  }
  func.func @transform_3(%arg0: i32) -> (i32, i32) {
    %c0_i32 = arith.constant 0 : i32
    %c0_i32_0 = arith.constant 0 : i32
    %c0_i32_1 = arith.constant 0 : i32
    return %c0_i32, %c0_i32_0 : i32, i32
  }
  func.func @transform_4(%arg0: i32) -> (i32, i32, i32) {
    %c0_i32 = arith.constant 0 : i32
    %c0_i32_0 = arith.constant 0 : i32
    %c0_i32_1 = arith.constant 0 : i32
    return %arg0, %c0_i32, %c0_i32_0 : i32, i32, i32
  }
}

</mosaic_0001>

<llo_original>
// kernel: tpu_custom_call.1
$region0: #{tpu_custom_call.1}
  #allocation0 [shape = 'u32[]', space=smem, size = 0x4, offset = 0x4, fixed_abs, tag = 'smem constant byte address 0x4 - core index']
  #allocation1 [shape = 'u32[144,128]{1,0:T(1,128)}', space=vmem, size = 0x12000, scoped, tag = 'internal scratch']
  %s0 = inlined_call_operand.hbm [shape: f32[9,256], index: 0, kind: input, shape index: {}]
  %s1 = inlined_call_operand.hbm [shape: f32[2,4,256], index: 1, kind: input, shape index: {}]
  %s2 = inlined_call_operand.hbm [shape: f32[8,37], index: 2, kind: input, shape index: {}]
  %s3 = inlined_call_operand.vmem [shape: f32[4,9], index: 3, kind: input, shape index: {}]
  %s4 = inlined_call_operand.hbm [shape: f32[2,4,256], index: 4, kind: output, shape index: {}]
  %s5 = sld [smem:[#allocation0]]
  $region61: #{tpu_custom_call.1} parent=0
    _
  %s7 = ssub.s32 1, %s5
  %s8 = scalar_select 0, %s7, %s5
  $region1: #{tpu_custom_call.1} parent=0
    #allocation2 [shape = 'u8[16384]{0}', space=vmem, size = 0x4000, scoped, tag = 'input window, operand 0, single buffered']
    #allocation3 [shape = 's32[2]{0}', space=sflag, size = 0x8, scoped, tag = 'scoped memory for tpu_custom_call.1']
    #allocation4 [shape = 's32[2]{0}', space=sflag, size = 0x8, scoped, tag = 'scoped memory for tpu_custom_call.1']
    #allocation5 [shape = 'u8[8192]{0}', space=vmem, size = 0x2000, scoped, tag = 'input window, operand 1']
    #allocation6 [shape = 's32[2]{0}', space=sflag, size = 0x8, scoped, tag = 'scoped memory for tpu_custom_call.1']
    #allocation7 [shape = 'u8[4096]{0}', space=vmem, size = 0x1000, scoped, tag = 'input window, operand 2, single buffered']
    #allocation8 [shape = 'u8[8192]{0}', space=vmem, size = 0x2000, scoped, tag = 'output window, operand 0']
    %9 = vsyncpa [#allocation3], 0
    %10 = vsyncpa [#allocation6], 0
    %s11 = scalar_lea.sflag [#allocation6], 1
    %12 = vsyncpa %s11, 0
    %13 = vsyncpa [#allocation4], 0
    %s14 = scalar_lea.sflag [#allocation4], 1
    %15 = vsyncpa %s14, 0
    loop: start=0, step=1, limit=4
    $region2: #{tpu_custom_call.1} parent=1 // loop_pre_header
      _
    $region3: #{tpu_custom_call.1} parent=1 // loop_header
      %s17 = sphi 0, %s21
      %p18 = scmp.ge.s32.totalorder %s17, 4
      %s25 = sphi 0, %s25
      %s27 = sphi 0, %s25
      %s28 = sphi 0, %s27
      %s42 = sphi 0, %s28
      %s48 = sphi 0, %s50
      %s51 = sphi 0, %s48
      %s52 = sphi 0, %s51
      %s68 = sphi 0, %s52
      %s72 = sphi 0, %s72
      %s74 = sphi 0, %s72
      %s75 = sphi 0, %s74
      %s89 = sphi 0, %s75
      %s93 = sphi 0, %s93
      %s95 = sphi 0, %s93
      %s96 = sphi 0, %s95
      %s110 = sphi 0, %s96
      %s116 = sphi 0, %s118
      %s119 = sphi 0, %s116
      %s120 = sphi 0, %s119
      %s136 = sphi 0, %s120
    $region4: #{tpu_custom_call.1} parent=1 // loop_header_branch
      %20 = sbr.rel (%p18) target = $region8
    $region5: #{tpu_custom_call.1} parent=1 // loop_body
      %s22 = ssub.s32 %s17, 1
      %s23 = ssub.s32 %s17, 2
      %s24 = sadd.s32 %s17, 1
      %s26 = sadd.s32 %s25, 1
      %p29 = scmp.eq.s32.totalorder %s17, 1
      %p30 = scmp.ne.s32.totalorder %s25, %s27
      %p31 = scmp.eq.s32.totalorder %s17, 0
      %p32 = por %p30, %p31
      %p33 = scmp.ne.s32.totalorder %s25, %s27
      %p34 = scmp.eq.s32.totalorder %s22, 1
      %p35 = por %p33, %p34
      %p36 = scmp.ne.s32.totalorder %s27, %s28
      %p37 = scmp.eq.s32.totalorder %s22, 0
      %p38 = por %p36, %p37
      %p39 = scmp.ne.s32.totalorder %s27, %s28
      %p40 = scmp.eq.s32.totalorder %s23, 1
      %p41 = por %p39, %p40
      %p43 = scmp.ne.s32.totalorder %s28, %s42
      %p44 = scmp.eq.s32.totalorder %s23, 0
      %p45 = por %p43, %p44
      %s46 = ssub.s32 %s17, %s24
      %p47 = scmp.eq.s32.totalorder %s46, 0
      %s49 = sadd.s32 %s48, 1
      %s50 = scalar_select %p47, %s48, %s49
      %p53 = pneg %p47
      %p54 = scmp.eq.s32.totalorder %s17, 1
      %p55 = por %p53, %p54
      %p56 = scmp.ne.s32.totalorder %s48, %s51
      %p57 = scmp.eq.s32.totalorder %s17, 0
      %p58 = por %p56, %p57
      %p59 = scmp.ne.s32.totalorder %s48, %s51
      %p60 = scmp.eq.s32.totalorder %s22, 1
      %p61 = por %p59, %p60
      %p62 = scmp.ne.s32.totalorder %s51, %s52
      %p63 = scmp.eq.s32.totalorder %s22, 0
      %p64 = por %p62, %p63
      %p65 = scmp.ne.s32.totalorder %s51, %s52
      %p66 = scmp.eq.s32.totalorder %s23, 1
      %p67 = por %p65, %p66
      %p69 = scmp.ne.s32.totalorder %s52, %s68
      %p70 = scmp.eq.s32.totalorder %s23, 0
      %p71 = por %p69, %p70
      %s73 = sadd.s32 %s72, 1
      %p76 = scmp.eq.s32.totalorder %s17, 1
      %p77 = scmp.ne.s32.totalorder %s72, %s74
      %p78 = scmp.eq.s32.totalorder %s17, 0
      %p79 = por %p77, %p78
      %p80 = scmp.ne.s32.totalorder %s72, %s74
      %p81 = scmp.eq.s32.totalorder %s22, 1
      %p82 = por %p80, %p81
      %p83 = scmp.ne.s32.totalorder %s74, %s75
      %p84 = scmp.eq.s32.totalorder %s22, 0
      %p85 = por %p83, %p84
      %p86 = scmp.ne.s32.totalorder %s74, %s75
      %p87 = scmp.eq.s32.totalorder %s23, 1
      %p88 = por %p86, %p87
      %p90 = scmp.ne.s32.totalorder %s75, %s89
      %p91 = scmp.eq.s32.totalorder %s23, 0
      %p92 = por %p90, %p91
      %s94 = sadd.s32 %s93, 1
      %p97 = scmp.eq.s32.totalorder %s17, 1
      %p98 = scmp.ne.s32.totalorder %s93, %s95
      %p99 = scmp.eq.s32.totalorder %s17, 0
      %p100 = por %p98, %p99
      %p101 = scmp.ne.s32.totalorder %s93, %s95
      %p102 = scmp.eq.s32.totalorder %s22, 1
      %p103 = por %p101, %p102
      %p104 = scmp.ne.s32.totalorder %s95, %s96
      %p105 = scmp.eq.s32.totalorder %s22, 0
      %p106 = por %p104, %p105
      %p107 = scmp.ne.s32.totalorder %s95, %s96
      %p108 = scmp.eq.s32.totalorder %s23, 1
      %p109 = por %p107, %p108
      %p111 = scmp.ne.s32.totalorder %s96, %s110
      %p112 = scmp.eq.s32.totalorder %s23, 0
      %p113 = por %p111, %p112
      %s114 = ssub.s32 %s17, %s24
      %p115 = scmp.eq.s32.totalorder %s114, 0
      %s117 = sadd.s32 %s116, 1
      %s118 = scalar_select %p115, %s116, %s117
      %p121 = pneg %p115
      %p122 = scmp.eq.s32.totalorder %s17, 1
      %p123 = por %p121, %p122
      %p124 = scmp.ne.s32.totalorder %s116, %s119
      %p125 = scmp.eq.s32.totalorder %s17, 0
      %p126 = por %p124, %p125
      %p127 = scmp.ne.s32.totalorder %s116, %s119
      %p128 = scmp.eq.s32.totalorder %s22, 1
      %p129 = por %p127, %p128
      %p130 = scmp.ne.s32.totalorder %s119, %s120
      %p131 = scmp.eq.s32.totalorder %s22, 0
      %p132 = por %p130, %p131
      %p133 = scmp.ne.s32.totalorder %s119, %s120
      %p134 = scmp.eq.s32.totalorder %s23, 1
      %p135 = por %p133, %p134
      %p137 = scmp.ne.s32.totalorder %s120, %s136
      %p138 = scmp.eq.s32.totalorder %s23, 0
      %p139 = por %p137, %p138
      %p140 = scmp.le.s32.totalorder 1, %s17
      %p141 = scmp.lt.s32.totalorder %s17, 3
      %p142 = pnand %p140, %p141
      %p143 = pneg %p142
      // Predicated region
      $region9: #{tpu_custom_call.1} parent=5 // pred_check
        _
      $region10: #{tpu_custom_call.1} parent=5 // pred_check_branch
        %145 = sbr.rel (%p142) target = $region12
      $region11: #{tpu_custom_call.1} parent=5 // pred_region
        %s146 = ssub.s32 %s17, 1
        // Predicated region
        $region13: #{tpu_custom_call.1} parent=11 // pred_check
          %p147 = pneg %p38
        $region14: #{tpu_custom_call.1} parent=11 // pred_check_branch
          %149 = sbr.rel (%p147) target = $region16
        $region15: #{tpu_custom_call.1} parent=11 // pred_region
          %s151 = ssub.s32 512, 512
          %152 = vsyncadd [#allocation3], %s151
          %s153 = sshll.u32 [#allocation2], 4
          %s154 = int_to_ptr.vmem [resolvable:$true] %s153
          %159 = dma.hbm_to_vmem [thread:$0]  %s0, 512, %s154, [#allocation3], 256, 256, 16
        $region16: #{tpu_custom_call.1} parent=11 // pred_fallthru
          _
        // Predicated region
        $region17: #{tpu_custom_call.1} parent=11 // pred_check
          %p160 = pneg %p85
        $region18: #{tpu_custom_call.1} parent=11 // pred_check_branch
          %162 = sbr.rel (%p160) target = $region20
        $region19: #{tpu_custom_call.1} parent=11 // pred_region
          %s164 = ssub.s32 128, 128
          %165 = vsyncadd [#allocation6], %s164
          %s167 = sshll.u32 [#allocation7], 4
          %s168 = int_to_ptr.vmem [resolvable:$true] %s167
          %170 = dma.hbm_to_vmem [thread:$0]  %s2, 128, %s168, [#allocation6]
        $region20: #{tpu_custom_call.1} parent=11 // pred_fallthru
          _
        // Predicated region
        $region21: #{tpu_custom_call.1} parent=11 // pred_check
          %p171 = pneg %p106
        $region22: #{tpu_custom_call.1} parent=11 // pred_check_branch
          %173 = sbr.rel (%p171) target = $region24
        $region23: #{tpu_custom_call.1} parent=11 // pred_region
          _
        $region24: #{tpu_custom_call.1} parent=11 // pred_fallthru
          _
      $region12: #{tpu_custom_call.1} parent=5 // pred_fallthru
        _
      %p174 = scmp.lt.s32.totalorder %s17, 2
      // Predicated region
      $region25: #{tpu_custom_call.1} parent=5 // pred_check
        %p175 = pneg %p174
      $region26: #{tpu_custom_call.1} parent=5 // pred_check_branch
        %177 = sbr.rel (%p175) target = $region28
      $region27: #{tpu_custom_call.1} parent=5 // pred_region
        // Predicated region
        $region29: #{tpu_custom_call.1} parent=27 // pred_check
          %p178 = pneg %p58
        $region30: #{tpu_custom_call.1} parent=27 // pred_check_branch
          %180 = sbr.rel (%p178) target = $region32
        $region31: #{tpu_custom_call.1} parent=27 // pred_region
          %s181 = sand.u32 %s17, 1
          %s182 = scalar_lea.sflag [#allocation6], %s181
          %s183 = sand.u32 %s48, 1
          %s184 = smul.addr %s183, 8
          %s185 = scalar_lea.vmem [#allocation5], %s184
          %s187 = ssub.s32 128, 128
          %188 = vsyncadd %s182, %s187
          %s189 = smul.addr %s17, 2
          %s190 = smul.addr %s189, 64
          %s191 = scalar_lea.hbm %s1, %s190
          %s193 = sshll.u32 %s185, 4
          %s194 = int_to_ptr.vmem [resolvable:$true] %s193
          %196 = dma.hbm_to_vmem [thread:$0]  %s191, 128, %s194, %s182
        $region32: #{tpu_custom_call.1} parent=27 // pred_fallthru
          _
      $region28: #{tpu_custom_call.1} parent=5 // pred_fallthru
        _
      %p197 = scmp.le.s32.totalorder 1, %s17
      %p198 = scmp.lt.s32.totalorder %s17, 3
      %p199 = pnand %p197, %p198
      %p200 = pneg %p199
      // Predicated region
      $region33: #{tpu_custom_call.1} parent=5 // pred_check
        _
      $region34: #{tpu_custom_call.1} parent=5 // pred_check_branch
        %202 = sbr.rel (%p199) target = $region36
      $region35: #{tpu_custom_call.1} parent=5 // pred_region
        %s203 = ssub.s32 %s17, 1
        // Predicated region
        $region37: #{tpu_custom_call.1} parent=35 // pred_check
          %p204 = pneg %p38
        $region38: #{tpu_custom_call.1} parent=35 // pred_check_branch
          %206 = sbr.rel (%p204) target = $region40
        $region39: #{tpu_custom_call.1} parent=35 // pred_region
          %207 = dma.done [#allocation3], 512
        $region40: #{tpu_custom_call.1} parent=35 // pred_fallthru
          _
        %s208 = sand.u32 %s22, 1
        %s209 = scalar_lea.sflag [#allocation6], %s208
        %s210 = sand.u32 %s51, 1
        %s211 = smul.addr %s210, 8
        %s212 = scalar_lea.vmem [#allocation5], %s211
        // Predicated region
        $region41: #{tpu_custom_call.1} parent=35 // pred_check
          %p213 = pneg %p64
        $region42: #{tpu_custom_call.1} parent=35 // pred_check_branch
          %215 = sbr.rel (%p213) target = $region44
        $region43: #{tpu_custom_call.1} parent=35 // pred_region
          %216 = dma.done %s209, 128
        $region44: #{tpu_custom_call.1} parent=35 // pred_fallthru
          _
        // Predicated region
        $region45: #{tpu_custom_call.1} parent=35 // pred_check
          %p217 = pneg %p85
        $region46: #{tpu_custom_call.1} parent=35 // pred_check_branch
          %219 = sbr.rel (%p217) target = $region48
        $region47: #{tpu_custom_call.1} parent=35 // pred_region
          %220 = dma.done [#allocation6], 128
        $region48: #{tpu_custom_call.1} parent=35 // pred_fallthru
          _
        %p221 = pneg %p38
        %p222 = pneg %p35
        %s223 = sand.u32 %s22, 1
        %s224 = scalar_lea.sflag [#allocation6], %s223
        %s225 = sand.u32 %s51, 1
        %s226 = smul.addr %s225, 8
        %s227 = scalar_lea.vmem [#allocation5], %s226
        %p228 = pneg %p64
        %p229 = pneg %p61
        %p230 = pneg %p85
        %p231 = pneg %p82
        %p232 = pneg %p106
        %p233 = pneg %p103
        %p234 = pneg %p132
        %p235 = pneg %p129
        %s236 = sand.u32 %s119, 1
        %s237 = scalar_lea.sflag [#allocation4], %s236
        %s238 = sand.u32 %s119, 1
        %s239 = smul.addr %s238, 8
        %s240 = scalar_lea.vmem [#allocation8], %s239
        %v241 = vld [vmem:[#allocation2] sm:$0xff]
        %v242 = vld [vmem:[#allocation2 + $0x8] sm:$0xff]
        %v243 = vld [vmem:[#allocation2 + $0x10] sm:$0x1]
        %v244 = vld [vmem:[#allocation2 + $0x18] sm:$0x1]
        %v245 = vld [vmem:[#allocation7] sm:$0xff]
        %v246 = vld [vmem:[%s3] sm:$0xf]
        %v247 = vld [vmem:[%s212] sm:$0xff]
        %v249 = vcombine.high %v247, %v247
        %251 = vrot.lane.b32.xlu0 %v247, 17
        %v252 = vpop.permute.xlu0 %251
        %253 = vrot.lane.b32.xlu0 %v249, 17
        %v254 = vpop.permute.xlu0 %253
        %v255 = vlaneseq
        %v256 = vand.u32 %v255, 127
        %vm257 = vcmp.lt.s32.totalorder %v256, 17
        %v258 = vsel %vm257, %v252, %v254
        %v259 = vsel %vm257, %v254, %v252
        %v260 = vlaneseq
        %v261 = vshrl.u32 %v260, 7
        %v262 = vsub.s32 0, %v261
        %v263 = vrot.slane %v241, %v262
        %v264 = vlaneseq
        %v265 = vshrl.u32 %v264, 7
        %v266 = vsub.s32 0, %v265
        %v267 = vrot.slane %v242, %v266
        %v268 = vmul.f32 %v259, %v263
        %v269 = vmul.f32 %v258, %v267
        %270 = vrot.lane.b32.xlu0 %v247, 16
        %v271 = vpop.permute.xlu0 %270
        %272 = vrot.lane.b32.xlu0 %v249, 16
        %v273 = vpop.permute.xlu0 %272
        %vm274 = vcmp.lt.s32.totalorder %v256, 16
        %v275 = vsel %vm274, %v271, %v273
        %v276 = vsel %vm274, %v273, %v271
        %v277 = vlaneseq
        %v278 = vshrl.u32 %v277, 7
        %v279 = vsub.s32 1, %v278
        %v280 = vrot.slane %v241, %v279
        %v281 = vlaneseq
        %v282 = vshrl.u32 %v281, 7
        %v283 = vsub.s32 1, %v282
        %v284 = vrot.slane %v242, %v283
        %v285 = vmul.f32 %v276, %v280
        %v286 = vmul.f32 %v275, %v284
        %287 = vrot.lane.b32.xlu0 %v247, 15
        %v288 = vpop.permute.xlu0 %287
        %289 = vrot.lane.b32.xlu0 %v249, 15
        %v290 = vpop.permute.xlu0 %289
        %vm291 = vcmp.lt.s32.totalorder %v256, 15
        %v292 = vsel %vm291, %v288, %v290
        %v293 = vsel %vm291, %v290, %v288
        %v294 = vlaneseq
        %v295 = vshrl.u32 %v294, 7
        %v296 = vsub.s32 2, %v295
        %v297 = vrot.slane %v241, %v296
        %v298 = vlaneseq
        %v299 = vshrl.u32 %v298, 7
        %v300 = vsub.s32 2, %v299
        %v301 = vrot.slane %v242, %v300
        %v302 = vmul.f32 %v293, %v297
        %v303 = vmul.f32 %v292, %v301
        %304 = vrot.lane.b32.xlu0 %v247, 1
        %v305 = vpop.permute.xlu0 %304
        %306 = vrot.lane.b32.xlu0 %v249, 1
        %v307 = vpop.permute.xlu0 %306
        %vm308 = vcmp.lt.s32.totalorder %v256, 1
        %v309 = vsel %vm308, %v305, %v307
        %v310 = vsel %vm308, %v307, %v305
        %v311 = vlaneseq
        %v312 = vshrl.u32 %v311, 7
        %v313 = vsub.s32 3, %v312
        %v314 = vrot.slane %v241, %v313
        %v315 = vlaneseq
        %v316 = vshrl.u32 %v315, 7
        %v317 = vsub.s32 3, %v316
        %v318 = vrot.slane %v242, %v317
        %v319 = vmul.f32 %v310, %v314
        %v320 = vmul.f32 %v309, %v318
        %321 = vrot.lane.b32.xlu0 %v247, 127
        %v322 = vpop.permute.xlu0 %321
        %323 = vrot.lane.b32.xlu0 %v249, 127
        %v324 = vpop.permute.xlu0 %323
        %vm325 = vcmp.lt.s32.totalorder %v256, 127
        %v326 = vsel %vm325, %v322, %v324
        %v327 = vsel %vm325, %v324, %v322
        %v328 = vlaneseq
        %v329 = vshrl.u32 %v328, 7
        %v330 = vsub.s32 5, %v329
        %v331 = vrot.slane %v241, %v330
        %v332 = vlaneseq
        %v333 = vshrl.u32 %v332, 7
        %v334 = vsub.s32 5, %v333
        %v335 = vrot.slane %v242, %v334
        %v336 = vmul.f32 %v326, %v331
        %v337 = vmul.f32 %v327, %v335
        %338 = vrot.lane.b32.xlu0 %v247, 113
        %v339 = vpop.permute.xlu0 %338
        %340 = vrot.lane.b32.xlu0 %v249, 113
        %v341 = vpop.permute.xlu0 %340
        %vm342 = vcmp.lt.s32.totalorder %v256, 113
        %v343 = vsel %vm342, %v339, %v341
        %v344 = vsel %vm342, %v341, %v339
        %v345 = vlaneseq
        %v346 = vshrl.u32 %v345, 7
        %v347 = vsub.s32 6, %v346
        %v348 = vrot.slane %v241, %v347
        %v349 = vlaneseq
        %v350 = vshrl.u32 %v349, 7
        %v351 = vsub.s32 6, %v350
        %v352 = vrot.slane %v242, %v351
        %v353 = vmul.f32 %v343, %v348
        %v354 = vmul.f32 %v344, %v352
        %355 = vrot.lane.b32.xlu0 %v247, 112
        %v356 = vpop.permute.xlu0 %355
        %357 = vrot.lane.b32.xlu0 %v249, 112
        %v358 = vpop.permute.xlu0 %357
        %vm359 = vcmp.lt.s32.totalorder %v256, 112
        %v360 = vsel %vm359, %v356, %v358
        %v361 = vsel %vm359, %v358, %v356
        %v362 = vlaneseq
        %v363 = vshrl.u32 %v362, 7
        %v364 = vsub.s32 7, %v363
        %v365 = vrot.slane %v241, %v364
        %v366 = vlaneseq
        %v367 = vshrl.u32 %v366, 7
        %v368 = vsub.s32 7, %v367
        %v369 = vrot.slane %v242, %v368
        %v370 = vmul.f32 %v360, %v365
        %v371 = vmul.f32 %v361, %v369
        %372 = vrot.lane.b32.xlu0 %v247, 111
        %v373 = vpop.permute.xlu0 %372
        %374 = vrot.lane.b32.xlu0 %v249, 111
        %v375 = vpop.permute.xlu0 %374
        %vm376 = vcmp.lt.s32.totalorder %v256, 111
        %v377 = vsel %vm376, %v373, %v375
        %v378 = vsel %vm376, %v375, %v373
        %v379 = vlaneseq
        %v380 = vshrl.u32 %v379, 7
        %v381 = vsub.s32 0, %v380
        %v382 = vrot.slane %v243, %v381
        %v383 = vlaneseq
        %v384 = vshrl.u32 %v383, 7
        %v385 = vsub.s32 0, %v384
        %v386 = vrot.slane %v244, %v385
        %v387 = vmul.f32 %v377, %v382
        %v388 = vmul.f32 %v378, %v386
        %v391 = vrot.slane %v285, 4
        %v392 = vrot.slane %v286, 4
        %v397 = vrot.slane %v319, 4
        %v398 = vrot.slane %v320, 4
        %v403 = vrot.slane %v336, 4
        %v404 = vrot.slane %v337, 4
        %v409 = vrot.slane %v370, 4
        %v410 = vrot.slane %v371, 4
        %vm413 = vcmask 1043456
        %v414 = vsel %vm413, %v268, %v391
        %v415 = vsel %vm413, %v269, %v392
        %v416 = vsel %vm413, %v302, %v397
        %v417 = vsel %vm413, %v303, %v398
        %v418 = vsel %vm413, %v247, %v403
        %v419 = vsel %vm413, %v249, %v404
        %v420 = vsel %vm413, %v353, %v409
        %v421 = vsel %vm413, %v354, %v410
        %v422 = vsel %vm413, %v387, 1.0
        %v423 = vsel %vm413, %v388, 1.0
        %vm424 = vcmask 302080
        %v426 = vsel %vm424, %v245, 0
        %vm428 = vcmask 1044480
        %v430 = vsel %vm428, %v422, 0
        %v433 = vsel %vm428, %v423, 0
        %435 = vmatprep.subr.mxu0 %v415
        %436 = vmatpush1.msra.mxu0 %v414
        %437 = vmatprep.subr.mxu0 %v417
        %438 = vmatpush1.msra.mxu0 %v416
        %439 = vmatprep.subr.mxu0 %v419
        %440 = vmatpush1.msra.mxu0 %v418
        %441 = vmatprep.subr.mxu0 %v421
        %442 = vmatpush1.msra.mxu0 %v420
        %443 = vmatprep.subr.mxu0 %v433
        %444 = vmatpush1.msra.mxu0 %v430
        %445 = vmatprep.subr.mxu0 0.0
        %446 = vmatpush1.msra.mxu0 0.0
        %447 = vmatprep.subr.mxu0 0.0
        %448 = vmatpush1.msra.mxu0 0.0
        %449 = vmatprep.subr.mxu0 0.0
        %450 = vmatpush1.msra.mxu0 0.0
        %451 = vmatprep.subr.mxu0 0.0
        %452 = vmatpush1.msra.mxu0 0.0
        %453 = vmatprep.subr.mxu0 0.0
        %454 = vmatpush1.msra.mxu0 0.0
        %455 = vmatprep.subr.mxu0 0.0
        %456 = vmatpush1.msra.mxu0 0.0
        %457 = vmatprep.subr.mxu0 0.0
        %458 = vmatpush1.msra.mxu0 0.0
        %459 = vmatprep.subr.mxu0 0.0
        %460 = vmatpush1.msra.mxu0 0.0
        %461 = vmatprep.subr.mxu0 0.0
        %462 = vmatpush1.msra.mxu0 0.0
        %463 = vmatprep.subr.mxu0 0.0
        %464 = vmatpush1.msra.mxu0 0.0
        %465 = vmatprep.subr.mxu0 0.0
        %466 = vmatpush1.msra.mxu0 0.0
        %467 = vmatprep.subr.mxu0 0.0
        %468 = vmatpush1.msra.mxu0 0.0
        %469 = vmatprep.subr.mxu0 0.0
        %470 = vmatpush1.msra.mxu0 0.0
        %471 = vmatprep.subr.mxu0 0.0
        %472 = vmatpush1.msra.mxu0 0.0
        %473 = vmatprep.subr.mxu0 0.0
        %474 = vmatpush1.msra.mxu0 0.0
        %475 = vmatprep.subr.mxu0 0.0
        %476 = vmatpush1.msra.mxu0 0.0
        %477 = vmatprep.subr.mxu0 0.0
        %478 = vmatpush1.msra.mxu0 0.0
        %479 = vmatprep.subr.mxu0 0.0
        %480 = vmatpush1.msra.mxu0 0.0
        %481 = vmatprep.subr.mxu0 0.0
        %482 = vmatpush1.msra.mxu0 0.0
        %483 = vmatprep.subr.mxu0 0.0
        %484 = vmatpush1.msra.mxu0 0.0
        %485 = vmatprep.subr.mxu0 0.0
        %486 = vmatpush1.msra.mxu0 0.0
        %487 = vmatprep.subr.mxu0 0.0
        %488 = vmatpush1.msra.mxu0 0.0
        %489 = vmatprep.subr.mxu0 0.0
        %490 = vmatpush1.msra.mxu0 0.0
        %491 = vmatprep.subr.mxu0 0.0
        %492 = vmatpush1.msra.mxu0 0.0
        %493 = vmatprep.subr.mxu0 0.0
        %494 = vmatpush1.msra.mxu0 0.0
        %495 = vmatprep.subr.mxu0 0.0
        %496 = vmatpush1.msra.mxu0 0.0
        %497 = vmatprep.subr.mxu0 0.0
        %498 = vmatpush1.msra.mxu0 0.0
        %499 = vmatprep.mubr.f32.mxu0 0.0
        %500 = vmatmul.mubr.f32.gmra.mrb[0].mxu0 %v426
        %v501 = vpop.f32.mrb[0].mxu0
        %v502 = vadd.f32 0.0, %v501
        %v503 = vpop.f32.mrb[0].mxu0
        %v504 = vadd.f32 0.0, %v503
        %505 = vdwg.mxu0
        %v506 = vmax.f32 %v502, 0.0
        %v507 = vmax.f32 %v504, 0.0
        %vm508 = vcmask 72704
        %v510 = vsel %vm508, %v246, 0
        %vm512 = vcmask 1040384
        %v514 = vsel %vm512, 1.0, 0
        %516 = vmatprep.subr.mxu0 %v507
        %517 = vmatpush1.msra.mxu0 %v506
        %518 = vmatprep.subr.mxu0 %v514
        %519 = vmatpush1.msra.mxu0 %v514
        %520 = vmatprep.subr.mxu0 0.0
        %521 = vmatpush1.msra.mxu0 0.0
        %522 = vmatprep.subr.mxu0 0.0
        %523 = vmatpush1.msra.mxu0 0.0
        %524 = vmatprep.subr.mxu0 0.0
        %525 = vmatpush1.msra.mxu0 0.0
        %526 = vmatprep.subr.mxu0 0.0
        %527 = vmatpush1.msra.mxu0 0.0
        %528 = vmatprep.subr.mxu0 0.0
        %529 = vmatpush1.msra.mxu0 0.0
        %530 = vmatprep.subr.mxu0 0.0
        %531 = vmatpush1.msra.mxu0 0.0
        %532 = vmatprep.subr.mxu0 0.0
        %533 = vmatpush1.msra.mxu0 0.0
        %534 = vmatprep.subr.mxu0 0.0
        %535 = vmatpush1.msra.mxu0 0.0
        %536 = vmatprep.subr.mxu0 0.0
        %537 = vmatpush1.msra.mxu0 0.0
        %538 = vmatprep.subr.mxu0 0.0
        %539 = vmatpush1.msra.mxu0 0.0
        %540 = vmatprep.subr.mxu0 0.0
        %541 = vmatpush1.msra.mxu0 0.0
        %542 = vmatprep.subr.mxu0 0.0
        %543 = vmatpush1.msra.mxu0 0.0
        %544 = vmatprep.subr.mxu0 0.0
        %545 = vmatpush1.msra.mxu0 0.0
        %546 = vmatprep.subr.mxu0 0.0
        %547 = vmatpush1.msra.mxu0 0.0
        %548 = vmatprep.subr.mxu0 0.0
        %549 = vmatpush1.msra.mxu0 0.0
        %550 = vmatprep.subr.mxu0 0.0
        %551 = vmatpush1.msra.mxu0 0.0
        %552 = vmatprep.subr.mxu0 0.0
        %553 = vmatpush1.msra.mxu0 0.0
        %554 = vmatprep.subr.mxu0 0.0
        %555 = vmatpush1.msra.mxu0 0.0
        %556 = vmatprep.subr.mxu0 0.0
        %557 = vmatpush1.msra.mxu0 0.0
        %558 = vmatprep.subr.mxu0 0.0
        %559 = vmatpush1.msra.mxu0 0.0
        %560 = vmatprep.subr.mxu0 0.0
        %561 = vmatpush1.msra.mxu0 0.0
        %562 = vmatprep.subr.mxu0 0.0
        %563 = vmatpush1.msra.mxu0 0.0
        %564 = vmatprep.subr.mxu0 0.0
        %565 = vmatpush1.msra.mxu0 0.0
        %566 = vmatprep.subr.mxu0 0.0
        %567 = vmatpush1.msra.mxu0 0.0
        %568 = vmatprep.subr.mxu0 0.0
        %569 = vmatpush1.msra.mxu0 0.0
        %570 = vmatprep.subr.mxu0 0.0
        %571 = vmatpush1.msra.mxu0 0.0
        %572 = vmatprep.subr.mxu0 0.0
        %573 = vmatpush1.msra.mxu0 0.0
        %574 = vmatprep.subr.mxu0 0.0
        %575 = vmatpush1.msra.mxu0 0.0
        %576 = vmatprep.subr.mxu0 0.0
        %577 = vmatpush1.msra.mxu0 0.0
        %578 = vmatprep.subr.mxu0 0.0
        %579 = vmatpush1.msra.mxu0 0.0
        %580 = vmatprep.mubr.f32.mxu0 0.0
        %581 = vmatmul.mubr.f32.gmra.mrb[0].mxu0 %v510
        %v582 = vpop.f32.mrb[0].mxu0
        %v583 = vadd.f32 %v247, %v582
        %v584 = vpop.f32.mrb[0].mxu0
        %v585 = vadd.f32 %v249, %v584
        %586 = vdwg.mxu0
        %v589 = vcombine.low %v583, %v585
        %591 = vst [vmem:[%s240] sm:$0xff] %v589
        %s592 = sand.u32 %s119, 1
        %s593 = scalar_lea.sflag [#allocation4], %s592
        %s594 = sand.u32 %s119, 1
        %s595 = smul.addr %s594, 8
        %s596 = scalar_lea.vmem [#allocation8], %s595
        // Predicated region
        $region49: #{tpu_custom_call.1} parent=35 // pred_check
          %p597 = pneg %p129
        $region50: #{tpu_custom_call.1} parent=35 // pred_check_branch
          %599 = sbr.rel (%p597) target = $region52
        $region51: #{tpu_custom_call.1} parent=35 // pred_region
          %s601 = ssub.s32 128, 128
          %602 = vsyncadd %s593, %s601
          %s603 = smul.addr %s22, 2
          %s604 = smul.addr %s603, 64
          %s605 = scalar_lea.hbm %s4, %s604
          %s607 = sshll.u32 %s596, 4
          %s608 = int_to_ptr.vmem [resolvable:$true] %s607
          %610 = dma.vmem_to_hbm [thread:$0]  %s608, 128, %s605, %s593
        $region52: #{tpu_custom_call.1} parent=35 // pred_fallthru
          _
      $region36: #{tpu_custom_call.1} parent=5 // pred_fallthru
        _
      %p611 = scmp.le.s32.totalorder 2, %s17
      // Predicated region
      $region53: #{tpu_custom_call.1} parent=5 // pred_check
        %p612 = pneg %p611
      $region54: #{tpu_custom_call.1} parent=5 // pred_check_branch
        %614 = sbr.rel (%p612) target = $region56
      $region55: #{tpu_custom_call.1} parent=5 // pred_region
        %s615 = ssub.s32 %s17, 2
        // Predicated region
        $region57: #{tpu_custom_call.1} parent=55 // pred_check
          %p616 = pneg %p135
        $region58: #{tpu_custom_call.1} parent=55 // pred_check_branch
          %618 = sbr.rel (%p616) target = $region60
        $region59: #{tpu_custom_call.1} parent=55 // pred_region
          %s619 = sand.u32 %s120, 1
          %s620 = scalar_lea.sflag [#allocation4], %s619
          %s621 = sand.u32 %s120, 1
          %s622 = smul.addr %s621, 8
          %s623 = scalar_lea.vmem [#allocation8], %s622
          %624 = dma.done %s620, 128
        $region60: #{tpu_custom_call.1} parent=55 // pred_fallthru
          _
      $region56: #{tpu_custom_call.1} parent=5 // pred_fallthru
        _
    $region6: #{tpu_custom_call.1} parent=1 // loop_footer
      %s21 = sadd.s32 1, %s17
    $region7: #{tpu_custom_call.1} parent=1 // loop_footer_branch
      %16 = sbr.rel target = $region3
    $region8: #{tpu_custom_call.1} parent=1 // loop_exit
      _
    %625 = vsyncpa [#allocation3], 1
    %s626 = scalar_lea.sflag [#allocation3], 1
    %627 = vsyncpa %s626, 1
    %628 = vsyncpa [#allocation6], 1
    %s629 = scalar_lea.sflag [#allocation6], 1
    %630 = vsyncpa %s629, 1
    %631 = vsyncpa [#allocation4], 1
    %s632 = scalar_lea.sflag [#allocation4], 1
    %633 = vsyncpa %s632, 1

</llo_original>
